<compile_context>
chip_gen: v7x
topology: tpu7x:2x2x1
jax: 0.10.0
libtpu: 0.0.40
codegen_flags: <defaults>
</compile_context>

<pallas_src>
import functools

import jax
import jax.numpy as jnp
from jax import lax
from jax.experimental import pallas as pl
from jax.experimental.pallas import tpu as pltpu


def _round_up(x, m):
    return ((x + m - 1) // m) * m


def _srl(x, k):
    """Logical right shift for int32 arrays (arithmetic shift + mask)."""
    return (x >> k) & jnp.int32((1 << (32 - k)) - 1)


def _standout_kernel(seed_ref, prev_ref, pi_ref, cur_ref, out_ref, *,
                     alpha, beta, n_cols):
    tb, tn = out_ref.shape

    # Gate logits on the MXU: [TB, D_in] x [TN, D_in]^T -> [TB, TN] (bf16 in, f32 acc).
    # TODO(synk): very large D_in is loaded whole per tile (no K-tiling of the
    # contraction axis); fine for typical Linear hidden sizes.
    a = prev_ref[...].astype(jnp.bfloat16)
    w = pi_ref[...].astype(jnp.bfloat16)
    logits = alpha * lax.dot_general(
        a, w, (((1,), (1,)), ((), ())), preferred_element_type=jnp.float32
    ) + beta

    # p = sigmoid(logits) = 1/(1+e);  inv_p = 1 + e.
    # clip(p, 1e-5, 1.0)  <=>  inv_p = min(1 + e, 1e5)  (exp overflow -> inf -> 1e5).
    e = jnp.exp(-logits)                                  # EUP slot
    inv_p = jnp.minimum(1.0 + e, 1e5)

    # Counter-based hash PRNG (lowbias32-style): u depends only on the global
    # element index and the seed, so the mask is independent of the tiling.
    i = pl.program_id(0)
    j = pl.program_id(1)
    rows = i * tb + lax.broadcasted_iota(jnp.int32, (tb, tn), 0)
    cols = j * tn + lax.broadcasted_iota(jnp.int32, (tb, tn), 1)
    x = rows * n_cols + cols                              # int32 wrap is fine for a hash input
    x = x * jnp.int32(-1640531535) + seed_ref[0]          # 0x9E3779B1 (wrapping mul)
    x = x ^ _srl(x, 16)
    x = x * jnp.int32(0x7FEB352D)
    x = x ^ _srl(x, 15)
    x = x * jnp.int32(-2073301365)                        # 0x846CA68B (wrapping mul)
    x = x ^ _srl(x, 16)
    u = _srl(x, 8).astype(jnp.float32) * (1.0 / (1 << 24))  # uniform in [0, 1)

    keep = u * inv_p < 1.0                                 # == (u < clip(p, 1e-5, 1))
    out_ref[...] = jnp.where(
        keep, inv_p * cur_ref[...].astype(jnp.float32), 0.0
    ).astype(out_ref.dtype)


def standout(previous, current, pi, seed, alpha=0.5, beta=1.0,
             block_b=256, block_n=256):
    """previous: [B, D_in], current: [B, D_out], pi: [D_out, D_in] (nn.Linear weight)."""
    B, D_in = previous.shape
    D_out, D_in2 = pi.shape
    assert D_in == D_in2 and current.shape == (B, D_out)

    # Tile sizes: batch tile multiple of 8 (sublane), D_out tile multiple of 128 (lane-dense).
    tb = min(block_b, _round_up(B, 8))
    tn = min(block_n, _round_up(D_out, 128))
    Bp = _round_up(B, tb)
    Np = _round_up(D_out, tn)

    prev_p = previous if Bp == B else jnp.pad(previous, ((0, Bp - B), (0, 0)))
    pi_p = pi if Np == D_out else jnp.pad(pi, ((0, Np - D_out), (0, 0)))
    cur_p = current
    if Bp != B or Np != D_out:
        cur_p = jnp.pad(current, ((0, Bp - B), (0, Np - D_out)))

    seed_arr = jnp.asarray([seed], dtype=jnp.int32)
    kernel = functools.partial(
        _standout_kernel, alpha=float(alpha), beta=float(beta), n_cols=Np)

    out = pl.pallas_call(
        kernel,
        out_shape=jax.ShapeDtypeStruct((Bp, Np), current.dtype),
        grid_spec=pltpu.PrefetchScalarGridSpec(
            num_scalar_prefetch=1,
            grid=(Bp // tb, Np // tn),
            in_specs=[
                pl.BlockSpec((tb, D_in), lambda i, j, s: (i, 0)),  # previous tile
                pl.BlockSpec((tn, D_in), lambda i, j, s: (j, 0)),  # pi row block (no transpose)
                pl.BlockSpec((tb, tn), lambda i, j, s: (i, j)),    # current tile
            ],
            out_specs=pl.BlockSpec((tb, tn), lambda i, j, s: (i, j)),
        ),
        compiler_params=pltpu.CompilerParams(
            dimension_semantics=("parallel", "parallel"),
            vmem_limit_bytes=48 * 1024 * 1024,
        ),
    )(seed_arr, prev_p, pi_p, cur_p)

    return out[:B, :D_out]


if __name__ == "__main__":
    key = jax.random.PRNGKey(0)
    k_prev, k_cur, k_pi = jax.random.split(key, 3)

    B, D_in, D_out = 8, 32, 32  # small shapes consistent with Linear(D_in, D_out)
    previous = jax.random.normal(k_prev, (B, D_in), dtype=jnp.float32)
    current = jax.random.normal(k_cur, (B, D_out), dtype=jnp.float32)
    # Deterministic "last layer" weight, shaped like nn.Linear(D_in, D_out).weight.
    pi = jax.random.normal(k_pi, (D_out, D_in), dtype=jnp.float32) * 0.1

    alpha, beta = 0.5, 1.0
    out = standout(previous, current, pi, seed=1234, alpha=alpha, beta=beta)
    out = jax.block_until_ready(out)

    assert out.shape == (B, D_out)
    assert bool(jnp.all(jnp.isfinite(out)))

    # Deterministic part of the reference (same bf16 gate matmul as the kernel):
    # every kept (non-zero) output element must equal current / p.
    logits = alpha * lax.dot_general(
        previous.astype(jnp.bfloat16), pi.astype(jnp.bfloat16),
        (((1,), (1,)), ((), ())), preferred_element_type=jnp.float32) + beta
    p_ref = jnp.clip(jax.nn.sigmoid(logits), 1e-5, 1.0)
    expected_kept = current / p_ref

    kept = out != 0.0
    err = jnp.abs(out - expected_kept)
    tol = 1e-3 + 1e-3 * jnp.abs(expected_kept)
    assert bool(jnp.all(jnp.where(kept, err <= tol, True))), \
        "kept elements do not equal current / p"

    # Keep-rate sanity (mean p ~ 0.73 for these inputs): catches a degenerate RNG.
    rate = float(jnp.mean(kept.astype(jnp.float32)))
    assert 0.4 < rate < 0.98, f"implausible keep rate {rate}"

    print("KERNEL_OK")
</pallas_src>

<mosaic_0001>
module attributes {stable_mosaic.version = 11 : i64} {
  func.func @_standout_kernel(%arg0: i32, %arg1: i32, %arg2: memref<1xi32, #tpu.memory_space<smem>>, %arg3: memref<8x32xf32, #tpu.memory_space<vmem>>, %arg4: memref<128x32xf32, #tpu.memory_space<vmem>>, %arg5: memref<8x128xf32, #tpu.memory_space<vmem>>, %arg6: memref<8x128xf32, #tpu.memory_space<vmem>>) attributes {dimension_semantics = [#tpu.dimension_semantics<parallel>, #tpu.dimension_semantics<parallel>], iteration_bounds = array<i64: 1, 1>, scalar_prefetch = 1 : i64, scratch_operands = 0 : i64, tpu.core_type = #tpu.core_type<tc>, window_params = [{transform_indices = @transform_0, window_bounds = array<i64: 8, 32>}, {transform_indices = @transform_1, window_bounds = array<i64: 128, 32>}, {transform_indices = @transform_2, window_bounds = array<i64: 8, 128>}, {transform_indices = @transform_3, window_bounds = array<i64: 8, 128>}]} {
    %c0 = arith.constant 0 : index
    %c0_0 = arith.constant 0 : index
    %0 = vector.load %arg3[%c0, %c0_0] : memref<8x32xf32, #tpu.memory_space<vmem>>, vector<8x32xf32>
    %1 = arith.truncf %0 : vector<8x32xf32> to vector<8x32xbf16>
    %c0_1 = arith.constant 0 : index
    %c0_2 = arith.constant 0 : index
    %2 = vector.load %arg4[%c0_1, %c0_2] : memref<128x32xf32, #tpu.memory_space<vmem>>, vector<128x32xf32>
    %3 = arith.truncf %2 : vector<128x32xf32> to vector<128x32xbf16>
    %cst = arith.constant dense<0.000000e+00> : vector<8x128xf32>
    %4 = tpu.matmul %1, %3, %cst {dimension_numbers = #tpu.dot_dimension_numbers<[1], [1], [0], [0], [0, 0, 1, 0], [], []>} : vector<8x32xbf16>, vector<128x32xbf16>, vector<8x128xf32> -> vector<8x128xf32>
    %cst_3 = arith.constant 5.000000e-01 : f32
    %5 = vector.broadcast %cst_3 : f32 to vector<8x128xf32>
    %6 = arith.mulf %5, %4 : vector<8x128xf32>
    %cst_4 = arith.constant 1.000000e+00 : f32
    %7 = vector.broadcast %cst_4 : f32 to vector<8x128xf32>
    %8 = arith.addf %6, %7 : vector<8x128xf32>
    %cst_5 = arith.constant 0.000000e+00 : f32
    %9 = vector.broadcast %cst_5 : f32 to vector<8x128xf32>
    %10 = arith.subf %9, %8 : vector<8x128xf32>
    %11 = math.exp %10 : vector<8x128xf32>
    %cst_6 = arith.constant 1.000000e+00 : f32
    %12 = vector.broadcast %cst_6 : f32 to vector<8x128xf32>
    %13 = arith.addf %12, %11 : vector<8x128xf32>
    %cst_7 = arith.constant 1.000000e+05 : f32
    %14 = vector.broadcast %cst_7 : f32 to vector<8x128xf32>
    %15 = arith.minimumf %13, %14 : vector<8x128xf32>
    %c8_i32 = arith.constant 8 : i32
    %16 = arith.muli %arg0, %c8_i32 : i32
    %17 = tpu.iota {dimensions = array<i32: 0>} : vector<8x128xi32>
    %18 = vector.broadcast %16 : i32 to vector<8x128xi32>
    %19 = arith.addi %18, %17 : vector<8x128xi32>
    %c128_i32 = arith.constant 128 : i32
    %20 = arith.muli %arg1, %c128_i32 : i32
    %21 = tpu.iota {dimensions = array<i32: 1>} : vector<8x128xi32>
    %22 = vector.broadcast %20 : i32 to vector<8x128xi32>
    %23 = arith.addi %22, %21 : vector<8x128xi32>
    %c128_i32_8 = arith.constant 128 : i32
    %24 = vector.broadcast %c128_i32_8 : i32 to vector<8x128xi32>
    %25 = arith.muli %19, %24 : vector<8x128xi32>
    %26 = arith.addi %25, %23 : vector<8x128xi32>
    %c-1640531535_i32 = arith.constant -1640531535 : i32
    %27 = vector.broadcast %c-1640531535_i32 : i32 to vector<8x128xi32>
    %28 = arith.muli %26, %27 : vector<8x128xi32>
    %c0_9 = arith.constant 0 : index
    %29 = memref.load %arg2[%c0_9] : memref<1xi32, #tpu.memory_space<smem>>
    %30 = vector.broadcast %29 : i32 to vector<8x128xi32>
    %31 = arith.addi %28, %30 : vector<8x128xi32>
    %c16_i32 = arith.constant 16 : i32
    %32 = vector.broadcast %c16_i32 : i32 to vector<8x128xi32>
    %33 = arith.shrsi %31, %32 : vector<8x128xi32>
    %c65535_i32 = arith.constant 65535 : i32
    %34 = vector.broadcast %c65535_i32 : i32 to vector<8x128xi32>
    %35 = arith.andi %33, %34 : vector<8x128xi32>
    %36 = arith.xori %31, %35 : vector<8x128xi32>
    %c2146121005_i32 = arith.constant 2146121005 : i32
    %37 = vector.broadcast %c2146121005_i32 : i32 to vector<8x128xi32>
    %38 = arith.muli %36, %37 : vector<8x128xi32>
    %c15_i32 = arith.constant 15 : i32
    %39 = vector.broadcast %c15_i32 : i32 to vector<8x128xi32>
    %40 = arith.shrsi %38, %39 : vector<8x128xi32>
    %c131071_i32 = arith.constant 131071 : i32
    %41 = vector.broadcast %c131071_i32 : i32 to vector<8x128xi32>
    %42 = arith.andi %40, %41 : vector<8x128xi32>
    %43 = arith.xori %38, %42 : vector<8x128xi32>
    %c-2073301365_i32 = arith.constant -2073301365 : i32
    %44 = vector.broadcast %c-2073301365_i32 : i32 to vector<8x128xi32>
    %45 = arith.muli %43, %44 : vector<8x128xi32>
    %c16_i32_10 = arith.constant 16 : i32
    %46 = vector.broadcast %c16_i32_10 : i32 to vector<8x128xi32>
    %47 = arith.shrsi %45, %46 : vector<8x128xi32>
    %c65535_i32_11 = arith.constant 65535 : i32
    %48 = vector.broadcast %c65535_i32_11 : i32 to vector<8x128xi32>
    %49 = arith.andi %47, %48 : vector<8x128xi32>
    %50 = arith.xori %45, %49 : vector<8x128xi32>
    %c8_i32_12 = arith.constant 8 : i32
    %51 = vector.broadcast %c8_i32_12 : i32 to vector<8x128xi32>
    %52 = arith.shrsi %50, %51 : vector<8x128xi32>
    %c16777215_i32 = arith.constant 16777215 : i32
    %53 = vector.broadcast %c16777215_i32 : i32 to vector<8x128xi32>
    %54 = arith.andi %52, %53 : vector<8x128xi32>
    %55 = arith.sitofp %54 : vector<8x128xi32> to vector<8x128xf32>
    %cst_13 = arith.constant 5.96046448E-8 : f32
    %56 = vector.broadcast %cst_13 : f32 to vector<8x128xf32>
    %57 = arith.mulf %55, %56 : vector<8x128xf32>
    %58 = arith.mulf %57, %15 : vector<8x128xf32>
    %cst_14 = arith.constant 1.000000e+00 : f32
    %59 = vector.broadcast %cst_14 : f32 to vector<8x128xf32>
    %60 = arith.cmpf olt, %58, %59 : vector<8x128xf32>
    %c0_15 = arith.constant 0 : index
    %c0_16 = arith.constant 0 : index
    %61 = vector.load %arg5[%c0_15, %c0_16] : memref<8x128xf32, #tpu.memory_space<vmem>>, vector<8x128xf32>
    %62 = arith.mulf %15, %61 : vector<8x128xf32>
    %cst_17 = arith.constant 0.000000e+00 : f32
    %63 = vector.broadcast %cst_17 : f32 to vector<8x128xf32>
    %64 = arith.select %60, %62, %63 : vector<8x128xi1>, vector<8x128xf32>
    %c0_18 = arith.constant 0 : index
    %c0_19 = arith.constant 0 : index
    %65 = vector.load %arg6[%c0_18, %c0_19] : memref<8x128xf32, #tpu.memory_space<vmem>>, vector<8x128xf32>
    tpu.vector_store %arg6[%c0_18, %c0_19], %64 {strides = array<i32>} : memref<8x128xf32, #tpu.memory_space<vmem>>, vector<8x128xf32>,
    return
  }
  func.func @transform_0(%arg0: i32, %arg1: i32, %arg2: memref<1xi32, #tpu.memory_space<smem>>) -> (i32, i32) {
    %c0_i32 = arith.constant 0 : i32
    %c0_i32_0 = arith.constant 0 : i32
    return %arg0, %c0_i32 : i32, i32
  }
  func.func @transform_1(%arg0: i32, %arg1: i32, %arg2: memref<1xi32, #tpu.memory_space<smem>>) -> (i32, i32) {
    %c0_i32 = arith.constant 0 : i32
    %c0_i32_0 = arith.constant 0 : i32
    return %arg1, %c0_i32 : i32, i32
  }
  func.func @transform_2(%arg0: i32, %arg1: i32, %arg2: memref<1xi32, #tpu.memory_space<smem>>) -> (i32, i32) {
    %c0_i32 = arith.constant 0 : i32
    return %arg0, %arg1 : i32, i32
  }
  func.func @transform_3(%arg0: i32, %arg1: i32, %arg2: memref<1xi32, #tpu.memory_space<smem>>) -> (i32, i32) {
    %c0_i32 = arith.constant 0 : i32
    return %arg0, %arg1 : i32, i32
  }
}

</mosaic_0001>

<llo_original>
// kernel: tpu_custom_call.1
$region0: #{tpu_custom_call.1}
  #allocation0 [shape = 'u32[]', space=smem, size = 0x4, offset = 0x4, fixed_abs, tag = 'smem constant byte address 0x4 - core index']
  #allocation1 [shape = 'u32[144,128]{1,0:T(1,128)}', space=vmem, size = 0x12000, scoped, tag = 'internal scratch']
  #allocation2 [shape = 's32[1]{0}', space=sflag, size = 0x4, scoped, tag = 'scoped memory for tpu_custom_call.1']
  #allocation3 [shape = 's32[1]{0:T(128)S(6)}', space=smem, size = 0x200, scoped, tag = 'prefetched SMEM operand 0']
  %s0 = inlined_call_operand.<no memory space> [shape: s32[1], index: 0, kind: input, shape index: {}]
  %s1 = inlined_call_operand.vmem [shape: f32[8,32], index: 1, kind: input, shape index: {}]
  %s2 = inlined_call_operand.vmem [shape: f32[128,32], index: 2, kind: input, shape index: {}]
  %s3 = inlined_call_operand.vmem [shape: f32[8,128], index: 3, kind: input, shape index: {}]
  %s4 = inlined_call_operand.hbm [shape: f32[8,128], index: 4, kind: output, shape index: {}]
  %s5 = sld [smem:[#allocation0]]
  $region22: #{tpu_custom_call.1} parent=0
    _
  %s7 = ssub.s32 1, %s5
  %s8 = scalar_select 0, %s7, %s5
  %9 = sst [smem:[#allocation3]] %s0
  $region1: #{tpu_custom_call.1} parent=0
    #allocation4 [shape = 'u8[4096]{0}', space=vmem, size = 0x1000, scoped, tag = 'output window, operand 0, single buffered']
    #allocation5 [shape = 's32[1]{0}', space=sflag, size = 0x4, scoped, tag = 'scoped memory for tpu_custom_call.1']
    %10 = vsyncpa [#allocation5], 0
    // Predicated region
    $region2: #{tpu_custom_call.1} parent=1 // pred_check
      _
    $region3: #{tpu_custom_call.1} parent=1 // pred_check_branch
      %12 = sbr.rel (0) target = $region5
    $region4: #{tpu_custom_call.1} parent=1 // pred_region
      _
    $region5: #{tpu_custom_call.1} parent=1 // pred_fallthru
      _
    // Predicated region
    $region6: #{tpu_custom_call.1} parent=1 // pred_check
      _
    $region7: #{tpu_custom_call.1} parent=1 // pred_check_branch
      %14 = sbr.rel (0) target = $region9
    $region8: #{tpu_custom_call.1} parent=1 // pred_region
      _
    $region9: #{tpu_custom_call.1} parent=1 // pred_fallthru
      _
    // Predicated region
    $region10: #{tpu_custom_call.1} parent=1 // pred_check
      _
    $region11: #{tpu_custom_call.1} parent=1 // pred_check_branch
      %16 = sbr.rel (0) target = $region13
    $region12: #{tpu_custom_call.1} parent=1 // pred_region
      _
    $region13: #{tpu_custom_call.1} parent=1 // pred_fallthru
      _
    %v18 = vld [vmem:[%s1] sm:$0xff]
    %v19 = vpack.c.bf16 %v18, %v18
    %v20 = vld [vmem:[%s2] sm:$0xff]
    %v21 = vld [vmem:[%s2 + $0x8] sm:$0xff]
    %v22 = vld [vmem:[%s2 + $0x10] sm:$0xff]
    %v23 = vld [vmem:[%s2 + $0x18] sm:$0xff]
    %v24 = vld [vmem:[%s2 + $0x20] sm:$0xff]
    %v25 = vld [vmem:[%s2 + $0x28] sm:$0xff]
    %v26 = vld [vmem:[%s2 + $0x30] sm:$0xff]
    %v27 = vld [vmem:[%s2 + $0x38] sm:$0xff]
    %v28 = vld [vmem:[%s2 + $0x40] sm:$0xff]
    %v29 = vld [vmem:[%s2 + $0x48] sm:$0xff]
    %v30 = vld [vmem:[%s2 + $0x50] sm:$0xff]
    %v31 = vld [vmem:[%s2 + $0x58] sm:$0xff]
    %v32 = vld [vmem:[%s2 + $0x60] sm:$0xff]
    %v33 = vld [vmem:[%s2 + $0x68] sm:$0xff]
    %v34 = vld [vmem:[%s2 + $0x70] sm:$0xff]
    %v35 = vld [vmem:[%s2 + $0x78] sm:$0xff]
    %v36 = vpack.c.bf16 %v21, %v20
    %v37 = vpack.c.bf16 %v23, %v22
    %v38 = vpack.c.bf16 %v25, %v24
    %v39 = vpack.c.bf16 %v27, %v26
    %v40 = vpack.c.bf16 %v29, %v28
    %v41 = vpack.c.bf16 %v31, %v30
    %v42 = vpack.c.bf16 %v33, %v32
    %v43 = vpack.c.bf16 %v35, %v34
    %vm44 = vcmask 261120
    %v46 = vsel %vm44, %v19, 0
    %v49 = vsel %vm44, %v36, 0
    %v52 = vsel %vm44, %v37, 0
    %v55 = vsel %vm44, %v38, 0
    %v58 = vsel %vm44, %v39, 0
    %v61 = vsel %vm44, %v40, 0
    %v64 = vsel %vm44, %v41, 0
    %v67 = vsel %vm44, %v42, 0
    %v70 = vsel %vm44, %v43, 0
    %72 = vmatprep.subr.bf16.mxu0 0
    %73 = vmatpush1.bf16.xpose.msra.mxu0 %v49
    %74 = vmatprep.subr.bf16.mxu0 0
    %75 = vmatpush1.bf16.xpose.msra.mxu0 %v52
    %76 = vmatprep.subr.bf16.mxu0 0
    %77 = vmatpush1.bf16.xpose.msra.mxu0 %v55
    %78 = vmatprep.subr.bf16.mxu0 0
    %79 = vmatpush1.bf16.xpose.msra.mxu0 %v58
    %80 = vmatprep.subr.bf16.mxu0 0
    %81 = vmatpush1.bf16.xpose.msra.mxu0 %v61
    %82 = vmatprep.subr.bf16.mxu0 0
    %83 = vmatpush1.bf16.xpose.msra.mxu0 %v64
    %84 = vmatprep.subr.bf16.mxu0 0
    %85 = vmatpush1.bf16.xpose.msra.mxu0 %v67
    %86 = vmatprep.subr.bf16.mxu0 0
    %87 = vmatpush1.bf16.xpose.msra.mxu0 %v70
    %88 = vmatprep.subr.bf16.mxu0 0
    %89 = vmatpush1.bf16.xpose.msra.mxu0 0
    %90 = vmatprep.subr.bf16.mxu0 0
    %91 = vmatpush1.bf16.xpose.msra.mxu0 0
    %92 = vmatprep.subr.bf16.mxu0 0
    %93 = vmatpush1.bf16.xpose.msra.mxu0 0
    %94 = vmatprep.subr.bf16.mxu0 0
    %95 = vmatpush1.bf16.xpose.msra.mxu0 0
    %96 = vmatprep.subr.bf16.mxu0 0
    %97 = vmatpush1.bf16.xpose.msra.mxu0 0
    %98 = vmatprep.subr.bf16.mxu0 0
    %99 = vmatpush1.bf16.xpose.msra.mxu0 0
    %100 = vmatprep.subr.bf16.mxu0 0
    %101 = vmatpush1.bf16.xpose.msra.mxu0 0
    %102 = vmatprep.subr.bf16.mxu0 0
    %103 = vmatpush1.bf16.xpose.msra.mxu0 0
    %104 = vmatprep.mubr.bf16.mxu0 0
    %105 = vmatmul.mubr.bf16.gmra.mrb[0].mxu0 %v46
    %v106 = vpop.f32.mrb[0].mxu0
    %v107 = vadd.f32 0.0, %v106
    %v108 = vpop.f32.mrb[0].mxu0
    %v109 = vpop.f32.mrb[0].mxu0
    %v110 = vpop.f32.mrb[0].mxu0
    %111 = vdwg.mxu0
    %v112 = vmul.f32 %v107, 0.5
    %v113 = vadd.f32 %v112, 1.0
    %v114 = vsub.f32 0.0, %v113
    %v115 = vmul.f32 %v114, 1.442695
    %v116 = vpow.pop %v115
    %v117 = vadd.f32 %v116, 1.0
    %v118 = vmin.f32 %v117, 100000.0
    %s119 = smul.u32 0, 8
    %v120 = vlaneseq
    %v121 = vshrl.u32 %v120, 7
    %v122 = vstv %s119
    %v123 = vadd.s32 %v122, %v121
    %s124 = smul.u32 0, 128
    %v125 = vlaneseq
    %v126 = vand.u32 %v125, 127
    %v127 = vstv %s124
    %v128 = vadd.s32 %v127, %v126
    %v129 = vmul.u32 %v123, 128
    %v130 = vadd.s32 %v129, %v128
    %v131 = vmul.u32 %v130, 2654435761
    %s132 = sld [smem:[#allocation3]]
    %v133 = vstv %s132
    %v134 = vadd.s32 %v131, %v133
    %v135 = vshra.s32 %v134, 16
    %v136 = vand.u32 %v135, 65535
    %v137 = vxor.u32 %v134, %v136
    %v138 = vmul.u32 %v137, 2146121005
    %v139 = vshra.s32 %v138, 15
    %v140 = vand.u32 %v139, 131071
    %v141 = vxor.u32 %v138, %v140
    %v142 = vmul.u32 %v141, 2221665931
    %v143 = vshra.s32 %v142, 16
    %v144 = vand.u32 %v143, 65535
    %v145 = vxor.u32 %v142, %v144
    %v146 = vshra.s32 %v145, 8
    %v147 = vand.u32 %v146, 16777215
    %v148 = vcvt.s32.f32 %v147
    %v149 = vmul.f32 %v148, 5.9604645e-08
    %v150 = vmul.f32 %v149, %v118
    %vm151 = vcmp.lt.f32.partialorder %v150, 1.0
    %v152 = vld [vmem:[%s3] sm:$0xff]
    %v153 = vmul.f32 %v118, %v152
    %v154 = vsel %vm151, %v153, 0.0
    %155 = vst [vmem:[#allocation4] sm:$0xff] %v154
    // Predicated region
    $region14: #{tpu_custom_call.1} parent=1 // pred_check
      _
    $region15: #{tpu_custom_call.1} parent=1 // pred_check_branch
      %157 = sbr.rel (0) target = $region17
    $region16: #{tpu_custom_call.1} parent=1 // pred_region
      %s159 = ssub.s32 128, 128
      %160 = vsyncadd [#allocation5], %s159
      %s162 = sshll.u32 [#allocation4], 4
      %s163 = int_to_ptr.vmem [resolvable:$true] %s162
      %165 = dma.vmem_to_hbm [thread:$0]  %s163, 128, %s4, [#allocation5]
    $region17: #{tpu_custom_call.1} parent=1 // pred_fallthru
      _
    // Predicated region
    $region18: #{tpu_custom_call.1} parent=1 // pred_check
      _
    $region19: #{tpu_custom_call.1} parent=1 // pred_check_branch
      %167 = sbr.rel (0) target = $region21
    $region20: #{tpu_custom_call.1} parent=1 // pred_region
      %168 = dma.done [#allocation5], 128
    $region21: #{tpu_custom_call.1} parent=1 // pred_fallthru
      _
    %169 = vsyncpa [#allocation5], 1

</llo_original>
